<compile_context>
chip_gen: v7x
topology: tpu7x:2x2x1
jax: 0.10.0
libtpu: 0.0.40
codegen_flags: <defaults>
</compile_context>

<pallas_src>
import functools
import math

import jax
import jax.numpy as jnp
from jax.experimental import pallas as pl
from jax.experimental.pallas import tpu as pltpu


def _round_up(x, m):
    return ((x + m - 1) // m) * m


def _embed_gather_kernel(tok_ref, emb_hbm, pe_ref, o_ref, buf, sem,
                         *, d_model, vocab, fold, fb):
    # tok_ref : SMEM int32 (R_pad,)            -- flattened token ids (scalar prefetch)
    # emb_hbm : HBM  f32  (vocab, d_model)     -- embedding table, never copied wholesale
    # pe_ref  : VMEM f32  (fb, fold*d_model)   -- folded positional-encoding block
    # o_ref   : VMEM f32  (fb, fold*d_model)   -- folded output block (lane-dense)
    # buf     : VMEM f32  (fb, fold*d_model)   -- gather landing buffer
    # sem     : DMA semaphore (1,)
    rows_per_block = fb * fold
    block_start = pl.program_id(0) * rows_per_block

    # 1) Issue one row DMA per token in this block. Each flat row r lands at
    #    folded row r // fold, lane offset (r % fold) * d_model (static offset).
    @pl.loop(0, fb)
    def _issue(f):
        for g in range(fold):  # static unroll -> static lane offsets
            tid = tok_ref[block_start + f * fold + g]
            tid = jnp.minimum(jnp.maximum(tid, 0), vocab - 1)  # clamp OOB ids
            pltpu.make_async_copy(
                emb_hbm.at[pl.ds(tid, 1), :],
                buf.at[pl.ds(f, 1), pl.ds(g * d_model, d_model)],
                sem.at[0],
            ).start()

    # 2) Wait for all row copies. All copies target the same semaphore and have
    #    identical size, so waiting once per issued copy (with an equal-sized
    #    stand-in descriptor) drains the semaphore exactly.
    @pl.loop(0, rows_per_block)
    def _wait(_):
        pltpu.make_async_copy(
            emb_hbm.at[pl.ds(0, 1), :],
            buf.at[pl.ds(0, 1), pl.ds(0, d_model)],
            sem.at[0],
        ).wait()

    # 3) Scale by sqrt(d_model), add positional encoding, store the whole block.
    scale = jnp.float32(math.sqrt(d_model))
    o_ref[...] = buf[...] * scale + pe_ref[...]


def make_positional_encoding(max_len, d_model):
    position = jnp.arange(0, max_len, dtype=jnp.float32)[:, None]            # (L, 1)
    div_term = jnp.exp(jnp.arange(0, d_model, 2, dtype=jnp.float32)
                       * (-(math.log(10000.0) / d_model)))                   # (D/2,)
    angles = position * div_term[None, :]                                    # (L, D/2)
    pe = jnp.zeros((max_len, d_model), dtype=jnp.float32)
    pe = pe.at[:, 0::2].set(jnp.sin(angles))
    pe = pe.at[:, 1::2].set(jnp.cos(angles))
    return pe                                                                # (L, D)


def transformer_embedding(tokens, emb_table, pe_full, *, block_rows=512):
    """tokens: int [B, S]; emb_table: f32 [vocab, d_model]; pe_full: f32 [max_len, d_model]."""
    B, S = tokens.shape
    vocab, d_model = emb_table.shape
    R = B * S

    # Lane folding: pack `fold` consecutive token rows into one 128-lane output row
    # so stores are unmasked full-lane vst's even when d_model < 128.
    if d_model < 128 and 128 % d_model == 0:
        fold = 128 // d_model
    else:
        fold = 1

    block_rows = max(8, _round_up(block_rows, 8))
    folded_total = -(-R // fold)
    fb = min(block_rows, _round_up(folded_total, 8))   # folded rows per grid block
    rows_per_block = fb * fold
    R_pad = _round_up(R, rows_per_block)
    num_blocks = R_pad // rows_per_block

    # Plain-JAX glue: flatten/pad token ids, tile positional encoding over batch
    # and fold it to the same lane-dense layout as the output.
    tok_flat = jnp.pad(tokens.reshape(-1).astype(jnp.int32), (0, R_pad - R))
    pe_rows = jnp.pad(jnp.tile(pe_full[:S], (B, 1)), ((0, R_pad - R), (0, 0)))
    pe_fold = pe_rows.reshape(R_pad // fold, fold * d_model)

    kernel = functools.partial(_embed_gather_kernel, d_model=d_model,
                               vocab=vocab, fold=fold, fb=fb)

    out_fold = pl.pallas_call(
        kernel,
        out_shape=jax.ShapeDtypeStruct((R_pad // fold, fold * d_model), jnp.float32),
        grid_spec=pltpu.PrefetchScalarGridSpec(
            num_scalar_prefetch=1,                           # token ids -> SMEM
            grid=(num_blocks,),
            in_specs=[
                pl.BlockSpec(memory_space=pl.ANY),           # embedding table stays in HBM
                pl.BlockSpec((fb, fold * d_model), lambda i, tok: (i, 0)),   # PE block
            ],
            out_specs=pl.BlockSpec((fb, fold * d_model), lambda i, tok: (i, 0)),
            scratch_shapes=[
                pltpu.VMEM((fb, fold * d_model), jnp.float32),   # gather landing buffer
                pltpu.SemaphoreType.DMA((1,)),
            ],
        ),
        compiler_params=pltpu.CompilerParams(
            dimension_semantics=("parallel",)),
    )(tok_flat, emb_table, pe_fold)

    # Unfold and strip padding.
    return out_fold.reshape(R_pad, d_model)[:R].reshape(B, S, d_model)


if __name__ == "__main__":
    # Small shapes consistent with the module: batch=2, seq=8, d_model=128
    # (lane-dense last dim), modest vocab to exercise the HBM row gather.
    d_model, vocab, max_len = 128, 1000, 512
    B, S = 2, 8
    # dropout p is irrelevant here: eval-mode identity (see TODO at top).

    key = jax.random.PRNGKey(0)
    k_emb, k_tok = jax.random.split(key)
    emb_table = jax.random.normal(k_emb, (vocab, d_model), dtype=jnp.float32)  # nn.Embedding ~ N(0,1)
    tokens = jax.random.randint(k_tok, (B, S), 0, vocab, dtype=jnp.int32)
    pe_full = make_positional_encoding(max_len, d_model)

    out = transformer_embedding(tokens, emb_table, pe_full)
    out = jax.block_until_ready(out)

    # Pure-JAX reference check.
    ref = emb_table[tokens] * jnp.float32(math.sqrt(d_model)) + pe_full[None, :S, :]
    assert out.shape == (B, S, d_model)
    assert jnp.allclose(out, ref, atol=1e-5, rtol=1e-5), float(jnp.max(jnp.abs(out - ref)))

    print("KERNEL_OK")
</pallas_src>

<mosaic_0001>
module attributes {stable_mosaic.version = 11 : i64} {
  func.func @_embed_gather_kernel(%arg0: i32, %arg1: memref<16xi32, #tpu.memory_space<smem>>, %arg2: memref<1000x128xf32, #tpu.memory_space<any>>, %arg3: memref<16x128xf32, #tpu.memory_space<vmem>>, %arg4: memref<16x128xf32, #tpu.memory_space<vmem>>, %arg5: memref<16x128xf32, #tpu.memory_space<vmem>>, %arg6: memref<1x!tpu.dma_semaphore, #tpu.memory_space<semaphore_mem>>) attributes {dimension_semantics = [#tpu.dimension_semantics<parallel>], iteration_bounds = array<i64: 1>, scalar_prefetch = 1 : i64, scratch_operands = 2 : i64, tpu.core_type = #tpu.core_type<tc>, window_params = [{}, {transform_indices = @transform_1, window_bounds = array<i64: 16, 128>}, {transform_indices = @transform_2, window_bounds = array<i64: 16, 128>}]} {
    %c16_i32 = arith.constant 16 : i32
    %0 = arith.muli %arg0, %c16_i32 : i32
    %c0_i32 = arith.constant 0 : i32
    %c16_i32_0 = arith.constant 16 : i32
    %1 = arith.addi %c0_i32, %c16_i32_0 : i32
    %c1_i32 = arith.constant 1 : i32
    scf.for %arg7 = %c0_i32 to %1 step %c1_i32  : i32 {
      %c1_i32_10 = arith.constant 1 : i32
      %9 = arith.muli %arg7, %c1_i32_10 : i32
      %c0_i32_11 = arith.constant 0 : i32
      %10 = arith.addi %c0_i32_11, %9 : i32
      %c1_i32_12 = arith.constant 1 : i32
      %11 = arith.muli %10, %c1_i32_12 : i32
      %12 = arith.addi %0, %11 : i32
      %c0_i32_13 = arith.constant 0 : i32
      %13 = arith.addi %12, %c0_i32_13 : i32
      %14 = arith.index_cast %13 : i32 to index
      %15 = memref.load %arg1[%14] : memref<16xi32, #tpu.memory_space<smem>>
      %c0_i32_14 = arith.constant 0 : i32
      %16 = arith.maxsi %15, %c0_i32_14 : i32
      %c999_i32 = arith.constant 999 : i32
      %17 = arith.minsi %16, %c999_i32 : i32
      %c0_i32_15 = arith.constant 0 : i32
      %c0_i32_16 = arith.constant 0 : i32
      %18 = tpu.memref_slice %arg2[%17, %c0_i32_16] : memref<1000x128xf32, #tpu.memory_space<any>> -> memref<1x128xf32, #tpu.memory_space<any>>
      %c0_i32_17 = arith.constant 0 : i32
      %19 = tpu.memref_slice %arg5[%10, %c0_i32_17] : memref<16x128xf32, #tpu.memory_space<vmem>> -> memref<1x128xf32, #tpu.memory_space<vmem>>
      %20 = tpu.memref_slice %arg6[%c0_i32_15] : memref<1x!tpu.dma_semaphore, #tpu.memory_space<semaphore_mem>> -> memref<1x!tpu.dma_semaphore, #tpu.memory_space<semaphore_mem>>
      %21 = tpu.memref_squeeze %20 : memref<1x!tpu.dma_semaphore, #tpu.memory_space<semaphore_mem>> -> memref<!tpu.dma_semaphore, #tpu.memory_space<semaphore_mem>>
      tpu.enqueue_dma source(%18 : memref<1x128xf32, #tpu.memory_space<any>>) target(%19 : memref<1x128xf32, #tpu.memory_space<vmem>>) target_semaphore(%21 : memref<!tpu.dma_semaphore, #tpu.memory_space<semaphore_mem>>)
    }
    %c16_i32_1 = arith.constant 16 : i32
    %c0_i32_2 = arith.constant 0 : i32
    %c16_i32_3 = arith.constant 16 : i32
    %2 = arith.addi %c0_i32_2, %c16_i32_3 : i32
    %c1_i32_4 = arith.constant 1 : i32
    scf.for %arg7 = %c0_i32_2 to %2 step %c1_i32_4  : i32 {
      %c0_i32_10 = arith.constant 0 : i32
      %c0_i32_11 = arith.constant 0 : i32
      %c0_i32_12 = arith.constant 0 : i32
      %9 = tpu.memref_slice %arg2[%c0_i32_11, %c0_i32_12] : memref<1000x128xf32, #tpu.memory_space<any>> -> memref<1x128xf32, #tpu.memory_space<any>>
      %c0_i32_13 = arith.constant 0 : i32
      %c0_i32_14 = arith.constant 0 : i32
      %10 = tpu.memref_slice %arg5[%c0_i32_13, %c0_i32_14] : memref<16x128xf32, #tpu.memory_space<vmem>> -> memref<1x128xf32, #tpu.memory_space<vmem>>
      %11 = tpu.memref_slice %arg6[%c0_i32_10] : memref<1x!tpu.dma_semaphore, #tpu.memory_space<semaphore_mem>> -> memref<1x!tpu.dma_semaphore, #tpu.memory_space<semaphore_mem>>
      %12 = tpu.memref_squeeze %11 : memref<1x!tpu.dma_semaphore, #tpu.memory_space<semaphore_mem>> -> memref<!tpu.dma_semaphore, #tpu.memory_space<semaphore_mem>>
      tpu.wait_dma2 semaphore(%12 : memref<!tpu.dma_semaphore, #tpu.memory_space<semaphore_mem>>) src(%9 : memref<1x128xf32, #tpu.memory_space<any>>) dst(%10 : memref<1x128xf32, #tpu.memory_space<vmem>>)
    }
    %c0 = arith.constant 0 : index
    %c0_5 = arith.constant 0 : index
    %3 = vector.load %arg5[%c0, %c0_5] : memref<16x128xf32, #tpu.memory_space<vmem>>, vector<16x128xf32>
    %cst = arith.constant 11.3137083 : f32
    %4 = vector.broadcast %cst : f32 to vector<16x128xf32>
    %5 = arith.mulf %3, %4 : vector<16x128xf32>
    %c0_6 = arith.constant 0 : index
    %c0_7 = arith.constant 0 : index
    %6 = vector.load %arg3[%c0_6, %c0_7] : memref<16x128xf32, #tpu.memory_space<vmem>>, vector<16x128xf32>
    %7 = arith.addf %5, %6 : vector<16x128xf32>
    %c0_8 = arith.constant 0 : index
    %c0_9 = arith.constant 0 : index
    %8 = vector.load %arg4[%c0_8, %c0_9] : memref<16x128xf32, #tpu.memory_space<vmem>>, vector<16x128xf32>
    tpu.vector_store %arg4[%c0_8, %c0_9], %7 {strides = array<i32>} : memref<16x128xf32, #tpu.memory_space<vmem>>, vector<16x128xf32>,
    return
  }
  func.func @transform_1(%arg0: i32, %arg1: memref<16xi32, #tpu.memory_space<smem>>) -> (i32, i32) {
    %c0_i32 = arith.constant 0 : i32
    %c0_i32_0 = arith.constant 0 : i32
    return %arg0, %c0_i32 : i32, i32
  }
  func.func @transform_2(%arg0: i32, %arg1: memref<16xi32, #tpu.memory_space<smem>>) -> (i32, i32) {
    %c0_i32 = arith.constant 0 : i32
    %c0_i32_0 = arith.constant 0 : i32
    return %arg0, %c0_i32 : i32, i32
  }
}

</mosaic_0001>

<llo_original>
// kernel: tpu_custom_call.1
$region0: #{tpu_custom_call.1}
  #allocation0 [shape = 'u32[]', space=smem, size = 0x4, offset = 0x4, fixed_abs, tag = 'smem constant byte address 0x4 - core index']
  #allocation1 [shape = 'u32[144,128]{1,0:T(1,128)}', space=vmem, size = 0x12000, scoped, tag = 'internal scratch']
  #allocation2 [shape = 'f32[16,128]{1,0:T(8,128)}', space=vmem, size = 0x2000, scoped, tag = 'scratch operand']
  #allocation3 [shape = 's32[1]{0}', space=sflag, size = 0x4, scoped, tag = 'scratch operand']
  #allocation4 [shape = 's32[1]{0}', space=sflag, size = 0x4, scoped, tag = 'scoped memory for tpu_custom_call.1']
  #allocation5 [shape = 'u8[512]{0}', space=smem, size = 0x200, scoped, tag = 'prefetched SMEM operand 0']
  #allocation10 [shape = 's32[]', space=sflag, size = 0x4, offset = 0, fixed_abs, tag = 'sflag constant byte address 0x0 - dummy sync flag']
  #allocation11 [shape = 's32[]', space=sflag, size = 0x4, offset = 0, fixed_abs, tag = 'sflag constant byte address 0x0 - dummy sync flag']
  #allocation12 [shape = 'u32[]', space=smem, size = 0x4, offset = 0x44, fixed_abs, tag = 'smem constant byte address 0x44 - assertion arg 0']
  #allocation13 [shape = 'u32[]', space=smem, size = 0x4, offset = 0x48, fixed_abs, tag = 'smem constant byte address 0x48 - assertion arg 1']
  %s0 = inlined_call_operand.hbm [shape: s32[16], index: 0, kind: input, shape index: {}]
  %s1 = inlined_call_operand.hbm [shape: f32[1000,128], index: 1, kind: input, shape index: {}]
  %s2 = inlined_call_operand.hbm [shape: f32[16,128], index: 2, kind: input, shape index: {}]
  %s3 = inlined_call_operand.hbm [shape: f32[16,128], index: 3, kind: output, shape index: {}]
  %s4 = sld [smem:[#allocation0]]
  $region36: #{tpu_custom_call.1} parent=0
    _
  %s6 = ssub.s32 1, %s4
  %s7 = scalar_select 0, %s6, %s4
  %9 = dma.hbm_to_smem %s0, 16, [#allocation5], [#allocation4]
  %10 = dma.done [#allocation4], 16
  %11 = sfence
  $region1: #{tpu_custom_call.1} parent=0
    #allocation6 [shape = 'u8[8192]{0}', space=vmem, size = 0x2000, scoped, tag = 'input window, operand 2, single buffered']
    #allocation7 [shape = 's32[1]{0}', space=sflag, size = 0x4, scoped, tag = 'scoped memory for tpu_custom_call.1']
    #allocation8 [shape = 's32[1]{0}', space=sflag, size = 0x4, scoped, tag = 'scoped memory for tpu_custom_call.1']
    #allocation9 [shape = 'u8[8192]{0}', space=vmem, size = 0x2000, scoped, tag = 'output window, operand 0, single buffered']
    %12 = vsyncpa [#allocation7], 0
    %13 = vsyncpa [#allocation8], 0
    // Predicated region
    $region2: #{tpu_custom_call.1} parent=1 // pred_check
      _
    $region3: #{tpu_custom_call.1} parent=1 // pred_check_branch
      %15 = sbr.rel (0) target = $region5
    $region4: #{tpu_custom_call.1} parent=1 // pred_region
      %s17 = ssub.s32 256, 256
      %18 = vsyncadd [#allocation7], %s17
      %s19 = sshll.u32 [#allocation6], 4
      %s20 = int_to_ptr.vmem [resolvable:$true] %s19
      %25 = dma.hbm_to_vmem [thread:$0]  %s2, 256, %s20, [#allocation7], 128, 128, 8
    $region5: #{tpu_custom_call.1} parent=1 // pred_fallthru
      _
    // Predicated region
    $region6: #{tpu_custom_call.1} parent=1 // pred_check
      _
    $region7: #{tpu_custom_call.1} parent=1 // pred_check_branch
      %27 = sbr.rel (0) target = $region9
    $region8: #{tpu_custom_call.1} parent=1 // pred_region
      %28 = dma.done [#allocation7], 256
    $region9: #{tpu_custom_call.1} parent=1 // pred_fallthru
      _
    %s29 = smul.u32 0, 16
    loop: start=0, step=1, limit=16
    $region10: #{tpu_custom_call.1} parent=1 // loop_pre_header
      _
    $region11: #{tpu_custom_call.1} parent=1 // loop_header
      %s31 = sphi 0, %s35
      %p32 = scmp.ge.s32.totalorder %s31, 16
    $region12: #{tpu_custom_call.1} parent=1 // loop_header_branch
      %34 = sbr.rel (%p32) target = $region16
    $region13: #{tpu_custom_call.1} parent=1 // loop_body
      %s36 = sadd.s32 %s29, %s31
      %s37 = sld [smem:[#allocation5 + %s36]]
      %p38 = scmp.gt.s32.totalorder %s37, 0
      %s39 = scalar_select %p38, %s37, 0
      %p40 = scmp.lt.s32.totalorder %s39, 999
      %s41 = scalar_select %p40, %s39, 999
      %s42 = smul.addr %s41, 16
      %s43 = scalar_lea.hbm %s1, %s42
      %s44 = scalar_lea.vmem [#allocation2], %s31
      // Predicated region
      $region17: #{tpu_custom_call.1} parent=13 // pred_check
        _
      $region18: #{tpu_custom_call.1} parent=13 // pred_check_branch
        %46 = sbr.rel target = $region20
      $region19: #{tpu_custom_call.1} parent=13 // pred_region
        %47 = sst [smem:[#allocation12]] [#allocation11]
        %48 = sst [smem:[#allocation13]] [#allocation10]
      $region20: #{tpu_custom_call.1} parent=13 // pred_fallthru
        _
      %50 = shalt.err (0)
      %s52 = sshll.u32 %s44, 4
      %s53 = int_to_ptr.vmem [resolvable:$true] %s52
      %55 = dma.hbm_to_vmem [thread:$0]  %s43, 16, %s53, [#allocation3]
    $region14: #{tpu_custom_call.1} parent=1 // loop_footer
      %s35 = sadd.s32 1, %s31
    $region15: #{tpu_custom_call.1} parent=1 // loop_footer_branch
      %30 = sbr.rel target = $region11
    $region16: #{tpu_custom_call.1} parent=1 // loop_exit
      _
    loop: start=0, step=1, limit=16
    $region21: #{tpu_custom_call.1} parent=1 // loop_pre_header
      _
    $region22: #{tpu_custom_call.1} parent=1 // loop_header
      %s57 = sphi 0, %s61
      %p58 = scmp.ge.s32.totalorder %s57, 16
    $region23: #{tpu_custom_call.1} parent=1 // loop_header_branch
      %60 = sbr.rel (%p58) target = $region27
    $region24: #{tpu_custom_call.1} parent=1 // loop_body
      %s62 = smul.u32 1, 1
      %s63 = sshll.u32 %s62, 4
      %64 = dma.done [#allocation3], %s63
    $region25: #{tpu_custom_call.1} parent=1 // loop_footer
      %s61 = sadd.s32 1, %s57
    $region26: #{tpu_custom_call.1} parent=1 // loop_footer_branch
      %56 = sbr.rel target = $region22
    $region27: #{tpu_custom_call.1} parent=1 // loop_exit
      _
    %v65 = vld [vmem:[#allocation2] sm:$0xff]
    %v66 = vld [vmem:[#allocation2 + $0x8] sm:$0xff]
    %v67 = vmul.f32 %v65, 11.313708
    %v68 = vmul.f32 %v66, 11.313708
    %v69 = vld [vmem:[#allocation6] sm:$0xff]
    %v70 = vld [vmem:[#allocation6 + $0x8] sm:$0xff]
    %v71 = vadd.f32 %v67, %v69
    %v72 = vadd.f32 %v68, %v70
    %73 = vst [vmem:[#allocation9] sm:$0xff] %v71
    %74 = vst [vmem:[#allocation9 + $0x8] sm:$0xff] %v72
    // Predicated region
    $region28: #{tpu_custom_call.1} parent=1 // pred_check
      _
    $region29: #{tpu_custom_call.1} parent=1 // pred_check_branch
      %76 = sbr.rel (0) target = $region31
    $region30: #{tpu_custom_call.1} parent=1 // pred_region
      %s78 = ssub.s32 256, 256
      %79 = vsyncadd [#allocation8], %s78
      %s80 = sshll.u32 [#allocation9], 4
      %s81 = int_to_ptr.vmem [resolvable:$true] %s80
      %86 = dma.vmem_to_hbm [thread:$0]  %s81, 256, %s3, [#allocation8], 128, 128, 8
    $region31: #{tpu_custom_call.1} parent=1 // pred_fallthru
      _
    // Predicated region
    $region32: #{tpu_custom_call.1} parent=1 // pred_check
      _
    $region33: #{tpu_custom_call.1} parent=1 // pred_check_branch
      %88 = sbr.rel (0) target = $region35
    $region34: #{tpu_custom_call.1} parent=1 // pred_region
      %89 = dma.done [#allocation8], 256
    $region35: #{tpu_custom_call.1} parent=1 // pred_fallthru
      _
    %90 = vsyncpa [#allocation7], 1
    %91 = vsyncpa [#allocation8], 1
  %92 = vsyncmov [#allocation3]
  %s93 = vpop.sfrf %92
  %p94 = scmp.eq.s32.totalorder %s93, 0
  %p95 = pneg %p94
  %97 = shalt.err (%p95)

</llo_original>
